<compile_context>
chip_gen: v7x
topology: tpu7x:2x2x1
jax: 0.10.0
libtpu: 0.0.40
codegen_flags: <defaults>
</compile_context>

<pallas_src>
import jax
import jax.numpy as jnp
from jax.experimental import pallas as pl
from jax.experimental.pallas import tpu as pltpu

EPS = 1e-5


def _round_up(n, m):
    return ((n + m - 1) // m) * m


# -----------------------------------------------------------------------------
# Kernel: one batch tile through the whole (BN-folded) network.
#   x(tb,16) @ W0 +b0 -> ReLU -> @W1 +b1 -> ReLU -> +res -> @W2 +b2 -> sigmoid
# Weights/biases are grid-invariant full-array blocks (fetched once, resident
# across all grid steps). Matmul operands use the weight dtype (bf16 default);
# accumulation and all elementwise math stay in f32.
# -----------------------------------------------------------------------------
def ffn_kernel(x_ref, w0_ref, w1_ref, w2_ref, b0_ref, b1_ref, b2_ref, o_ref):
    wdt = w0_ref.dtype

    # layer 0: (input BN ∘ linear_0 ∘ bn0) folded -> ReLU
    h = jnp.dot(x_ref[...].astype(wdt), w0_ref[...],
                preferred_element_type=jnp.float32) + b0_ref[...]
    h = jnp.maximum(h, 0.0)                                    # (tb, H) f32

    # layer 1: (linear_1 ∘ bn1) folded -> ReLU -> + residual
    res = h
    h = jnp.dot(h.astype(wdt), w1_ref[...],
                preferred_element_type=jnp.float32) + b1_ref[...]
    h = jnp.maximum(h, 0.0) + res

    # output layer: linear_2 -> sigmoid over the real F_out columns only
    o = jnp.dot(h.astype(wdt), w2_ref[...],
                preferred_element_type=jnp.float32) + b2_ref[...]
    o_ref[...] = jax.nn.sigmoid(o).astype(o_ref.dtype)


# -----------------------------------------------------------------------------
# Host-side eval-mode BN folding; weights kept at natural shapes.
# -----------------------------------------------------------------------------
def fold_params(p, matmul_dtype=jnp.bfloat16):
    f32 = jnp.float32

    def bn_scale_shift(g, beta, m, v):
        s = g.astype(f32) * jax.lax.rsqrt(v.astype(f32) + EPS)    # (1, C)
        return s, beta.astype(f32) - m.astype(f32) * s            # y = x*s + shift

    # input BN folded into linear_0 on the input side
    s_in, t_in = bn_scale_shift(p["bn_in_g"], p["bn_in_b"], p["bn_in_m"], p["bn_in_v"])
    w0 = s_in.T * p["w0"].astype(f32)                             # scale rows of W0
    b0 = t_in @ p["w0"].astype(f32) + p["b0"].astype(f32)

    # bn0 folded into linear_0 on the output side
    s0, t0 = bn_scale_shift(p["bn0_g"], p["bn0_b"], p["bn0_m"], p["bn0_v"])
    w0 = w0 * s0
    b0 = b0 * s0 + t0

    # bn1 folded into linear_1 on the output side
    s1, t1 = bn_scale_shift(p["bn1_g"], p["bn1_b"], p["bn1_m"], p["bn1_v"])
    w1 = p["w1"].astype(f32) * s1
    b1 = p["b1"].astype(f32) * s1 + t1

    w2 = p["w2"].astype(f32)
    b2 = p["b2"].astype(f32)

    # Weights in the MXU operand dtype; biases stay f32 (added to f32 accum).
    return (w0.astype(matmul_dtype), w1.astype(matmul_dtype), w2.astype(matmul_dtype),
            b0, b1, b2)


# -----------------------------------------------------------------------------
# Wrapper: natural-width blocks, cdiv batch grid, >=2 steps for v7x megacore.
# -----------------------------------------------------------------------------
def ffn_pallas(x, params, *, tile_b=2048, matmul_dtype=jnp.bfloat16,
               vmem_limit_bytes=32 * 1024 * 1024):
    B, F_in = x.shape
    H = params["w0"].shape[1]
    F_out = params["w2"].shape[1]
    assert params["w0"].shape[0] == F_in
    assert tile_b % 8 == 0, "tile_b must be a multiple of 8 (sublane)"

    w0, w1, w2, b0, b1, b2 = fold_params(params, matmul_dtype)

    # Batch tile: as large as requested, but never larger than the (8-aligned)
    # batch, and small enough that there are >=2 grid steps whenever B allows
    # it, so the "parallel" batch axis can shard across both TCs on v7x.
    tile_b_eff = min(tile_b, _round_up(B, 8))
    if B > 8:
        tile_b_eff = min(tile_b_eff, _round_up(pl.cdiv(B, 2), 8))
    grid = (pl.cdiv(B, tile_b_eff),)

    flops_per_row = 2 * (F_in * H + H * H + H * F_out)
    param_bytes = sum(int(a.size) * a.dtype.itemsize for a in (w0, w1, w2, b0, b1, b2))
    cost = pl.CostEstimate(
        flops=int(B * flops_per_row),
        transcendentals=int(B * F_out),
        bytes_accessed=int(B * F_in * x.dtype.itemsize + B * F_out * 4 + param_bytes),
    )

    return pl.pallas_call(
        ffn_kernel,
        out_shape=jax.ShapeDtypeStruct((B, F_out), jnp.float32),
        grid=grid,
        in_specs=[
            # batch-tiled activations at natural width (no lane padding)
            pl.BlockSpec((tile_b_eff, F_in), lambda i: (i, 0)),
            # grid-invariant parameters (full-array blocks, DMA'd once)
            pl.BlockSpec(w0.shape, lambda i: (0, 0)),
            pl.BlockSpec(w1.shape, lambda i: (0, 0)),
            pl.BlockSpec(w2.shape, lambda i: (0, 0)),
            pl.BlockSpec(b0.shape, lambda i: (0, 0)),
            pl.BlockSpec(b1.shape, lambda i: (0, 0)),
            pl.BlockSpec(b2.shape, lambda i: (0, 0)),
        ],
        out_specs=pl.BlockSpec((tile_b_eff, F_out), lambda i: (i, 0)),
        compiler_params=pltpu.CompilerParams(
            dimension_semantics=("parallel",),
            vmem_limit_bytes=vmem_limit_bytes,
        ),
        cost_estimate=cost,
    )(x, w0, w1, w2, b0, b1, b2)


# -----------------------------------------------------------------------------
# Pure-JAX reference (unfused, mirrors the PyTorch forward in eval mode).
# -----------------------------------------------------------------------------
def _bn(x, gamma, beta, mean, var):
    return (x - mean) * jax.lax.rsqrt(var + EPS) * gamma + beta


def ffn_reference(x, p):
    out = _bn(x, p["bn_in_g"], p["bn_in_b"], p["bn_in_m"], p["bn_in_v"])
    h = out @ p["w0"] + p["b0"]
    h = _bn(h, p["bn0_g"], p["bn0_b"], p["bn0_m"], p["bn0_v"])
    h = jnp.maximum(h, 0.0)
    res = h
    h = h @ p["w1"] + p["b1"]
    h = _bn(h, p["bn1_g"], p["bn1_b"], p["bn1_m"], p["bn1_v"])
    h = jnp.maximum(h, 0.0)
    h = h + res
    o = h @ p["w2"] + p["b2"]
    return jax.nn.sigmoid(o)


def init_params(key, input_size, hidden_size, output_size):
    ks = jax.random.split(key, 18)
    p = {}

    def linear(kw, kb, fan_in, fan_out):
        bound = 1.0 / jnp.sqrt(fan_in)
        w = jax.random.uniform(kw, (fan_in, fan_out), jnp.float32, -bound, bound)
        b = jax.random.uniform(kb, (1, fan_out), jnp.float32, -bound, bound)
        return w, b

    p["w0"], p["b0"] = linear(ks[0], ks[1], input_size, hidden_size)
    p["w1"], p["b1"] = linear(ks[2], ks[3], hidden_size, hidden_size)
    p["w2"], p["b2"] = linear(ks[4], ks[5], hidden_size, output_size)

    def bn(kg, kb, km, kv, c):
        g = 1.0 + 0.1 * jax.random.normal(kg, (1, c), jnp.float32)
        b = 0.1 * jax.random.normal(kb, (1, c), jnp.float32)
        m = 0.1 * jax.random.normal(km, (1, c), jnp.float32)
        v = jnp.abs(1.0 + 0.1 * jax.random.normal(kv, (1, c), jnp.float32))
        return g, b, m, v

    p["bn_in_g"], p["bn_in_b"], p["bn_in_m"], p["bn_in_v"] = bn(
        ks[6], ks[7], ks[8], ks[9], input_size)
    p["bn0_g"], p["bn0_b"], p["bn0_m"], p["bn0_v"] = bn(
        ks[10], ks[11], ks[12], ks[13], hidden_size)
    p["bn1_g"], p["bn1_b"], p["bn1_m"], p["bn1_v"] = bn(
        ks[14], ks[15], ks[16], ks[17], hidden_size)
    return p


if __name__ == "__main__":
    INPUT_SIZE, HIDDEN_SIZE, OUTPUT_SIZE = 16, 32, 8
    BATCH = 64  # -> tile_b_eff=32, grid=(2,): exercises pipelining / megacore

    key = jax.random.PRNGKey(0)
    k_x, k_p = jax.random.split(key)
    x = jax.random.normal(k_x, (BATCH, INPUT_SIZE), jnp.float32)
    params = init_params(k_p, INPUT_SIZE, HIDDEN_SIZE, OUTPUT_SIZE)

    ref = jax.block_until_ready(ffn_reference(x, params))

    # f32 MXU-operand path: tight check of BN-folding algebra + blocking.
    out_f32 = jax.block_until_ready(ffn_pallas(x, params, matmul_dtype=jnp.float32))
    assert out_f32.shape == (BATCH, OUTPUT_SIZE)
    err_f32 = float(jnp.max(jnp.abs(out_f32 - ref)))
    assert jnp.allclose(out_f32, ref, atol=1e-4, rtol=1e-4), f"f32 max_err={err_f32}"

    # Default bf16 MXU-operand path (f32 accumulation): looser tolerance.
    out_bf16 = jax.block_until_ready(ffn_pallas(x, params))
    assert out_bf16.shape == (BATCH, OUTPUT_SIZE)
    err_bf16 = float(jnp.max(jnp.abs(out_bf16 - ref)))
    assert jnp.allclose(out_bf16, ref, atol=2e-2, rtol=2e-2), f"bf16 max_err={err_bf16}"

    print("KERNEL_OK")
</pallas_src>

<mosaic_0001>
module attributes {stable_mosaic.version = 11 : i64} {
  func.func @ffn_kernel(%arg0: i32, %arg1: memref<32x16xf32, #tpu.memory_space<vmem>>, %arg2: memref<16x32xf32, #tpu.memory_space<vmem>>, %arg3: memref<32x32xf32, #tpu.memory_space<vmem>>, %arg4: memref<32x8xf32, #tpu.memory_space<vmem>>, %arg5: memref<1x32xf32, #tpu.memory_space<vmem>>, %arg6: memref<1x32xf32, #tpu.memory_space<vmem>>, %arg7: memref<1x8xf32, #tpu.memory_space<vmem>>, %arg8: memref<32x8xf32, #tpu.memory_space<vmem>>) attributes {dimension_semantics = [#tpu.dimension_semantics<parallel>], iteration_bounds = array<i64: 2>, scalar_prefetch = 0 : i64, scratch_operands = 0 : i64, tpu.core_type = #tpu.core_type<tc>, window_params = [{transform_indices = @transform_0, window_bounds = array<i64: 32, 16>}, {pipeline_mode = #tpu.pipeline_mode<synchronous>, transform_indices = @transform_1, window_bounds = array<i64: 16, 32>}, {pipeline_mode = #tpu.pipeline_mode<synchronous>, transform_indices = @transform_2, window_bounds = array<i64: 32, 32>}, {pipeline_mode = #tpu.pipeline_mode<synchronous>, transform_indices = @transform_3, window_bounds = array<i64: 32, 8>}, {pipeline_mode = #tpu.pipeline_mode<synchronous>, transform_indices = @transform_4, window_bounds = array<i64: 1, 32>}, {pipeline_mode = #tpu.pipeline_mode<synchronous>, transform_indices = @transform_5, window_bounds = array<i64: 1, 32>}, {pipeline_mode = #tpu.pipeline_mode<synchronous>, transform_indices = @transform_6, window_bounds = array<i64: 1, 8>}, {transform_indices = @transform_7, window_bounds = array<i64: 32, 8>}]} {
    %c0 = arith.constant 0 : index
    %c0_0 = arith.constant 0 : index
    %0 = vector.load %arg1[%c0, %c0_0] : memref<32x16xf32, #tpu.memory_space<vmem>>, vector<32x16xf32>
    %c0_1 = arith.constant 0 : index
    %c0_2 = arith.constant 0 : index
    %1 = vector.load %arg2[%c0_1, %c0_2] : memref<16x32xf32, #tpu.memory_space<vmem>>, vector<16x32xf32>
    %cst = arith.constant dense<0.000000e+00> : vector<32x32xf32>
    %2 = tpu.matmul %0, %1, %cst {dimension_numbers = #tpu.dot_dimension_numbers<[1], [0], [0], [1], [0, 0, 1, 1], [], []>} : vector<32x16xf32>, vector<16x32xf32>, vector<32x32xf32> -> vector<32x32xf32>
    %c0_3 = arith.constant 0 : index
    %c0_4 = arith.constant 0 : index
    %3 = vector.load %arg5[%c0_3, %c0_4] : memref<1x32xf32, #tpu.memory_space<vmem>>, vector<1x32xf32>
    %4 = vector.broadcast %3 : vector<1x32xf32> to vector<32x32xf32>
    %5 = arith.addf %2, %4 : vector<32x32xf32>
    %cst_5 = arith.constant 0.000000e+00 : f32
    %6 = vector.broadcast %cst_5 : f32 to vector<32x32xf32>
    %7 = arith.maximumf %5, %6 : vector<32x32xf32>
    %c0_6 = arith.constant 0 : index
    %c0_7 = arith.constant 0 : index
    %8 = vector.load %arg3[%c0_6, %c0_7] : memref<32x32xf32, #tpu.memory_space<vmem>>, vector<32x32xf32>
    %cst_8 = arith.constant dense<0.000000e+00> : vector<32x32xf32>
    %9 = tpu.matmul %7, %8, %cst_8 {dimension_numbers = #tpu.dot_dimension_numbers<[1], [0], [0], [1], [0, 0, 1, 1], [], []>} : vector<32x32xf32>, vector<32x32xf32>, vector<32x32xf32> -> vector<32x32xf32>
    %c0_9 = arith.constant 0 : index
    %c0_10 = arith.constant 0 : index
    %10 = vector.load %arg6[%c0_9, %c0_10] : memref<1x32xf32, #tpu.memory_space<vmem>>, vector<1x32xf32>
    %11 = vector.broadcast %10 : vector<1x32xf32> to vector<32x32xf32>
    %12 = arith.addf %9, %11 : vector<32x32xf32>
    %cst_11 = arith.constant 0.000000e+00 : f32
    %13 = vector.broadcast %cst_11 : f32 to vector<32x32xf32>
    %14 = arith.maximumf %12, %13 : vector<32x32xf32>
    %15 = arith.addf %14, %7 : vector<32x32xf32>
    %c0_12 = arith.constant 0 : index
    %c0_13 = arith.constant 0 : index
    %16 = vector.load %arg4[%c0_12, %c0_13] : memref<32x8xf32, #tpu.memory_space<vmem>>, vector<32x8xf32>
    %cst_14 = arith.constant dense<0.000000e+00> : vector<32x8xf32>
    %17 = tpu.matmul %15, %16, %cst_14 {dimension_numbers = #tpu.dot_dimension_numbers<[1], [0], [0], [1], [0, 0, 1, 1], [], []>} : vector<32x32xf32>, vector<32x8xf32>, vector<32x8xf32> -> vector<32x8xf32>
    %c0_15 = arith.constant 0 : index
    %c0_16 = arith.constant 0 : index
    %18 = vector.load %arg7[%c0_15, %c0_16] : memref<1x8xf32, #tpu.memory_space<vmem>>, vector<1x8xf32>
    %19 = vector.broadcast %18 : vector<1x8xf32> to vector<32x8xf32>
    %20 = arith.addf %17, %19 : vector<32x8xf32>
    %21 = arith.negf %20 : vector<32x8xf32>
    %22 = math.exp %21 : vector<32x8xf32>
    %cst_17 = arith.constant 1.000000e+00 : f32
    %23 = vector.broadcast %cst_17 : f32 to vector<32x8xf32>
    %24 = arith.addf %23, %22 : vector<32x8xf32>
    %25 = arith.divf %23, %24 : vector<32x8xf32>
    %c0_18 = arith.constant 0 : index
    %c0_19 = arith.constant 0 : index
    %26 = vector.load %arg8[%c0_18, %c0_19] : memref<32x8xf32, #tpu.memory_space<vmem>>, vector<32x8xf32>
    tpu.vector_store %arg8[%c0_18, %c0_19], %25 {strides = array<i32>} : memref<32x8xf32, #tpu.memory_space<vmem>>, vector<32x8xf32>,
    return
  }
  func.func @transform_0(%arg0: i32) -> (i32, i32) {
    %c0_i32 = arith.constant 0 : i32
    %c0_i32_0 = arith.constant 0 : i32
    return %arg0, %c0_i32 : i32, i32
  }
  func.func @transform_1(%arg0: i32) -> (i32, i32) {
    %c0_i32 = arith.constant 0 : i32
    %c0_i32_0 = arith.constant 0 : i32
    %c0_i32_1 = arith.constant 0 : i32
    return %c0_i32, %c0_i32_0 : i32, i32
  }
  func.func @transform_2(%arg0: i32) -> (i32, i32) {
    %c0_i32 = arith.constant 0 : i32
    %c0_i32_0 = arith.constant 0 : i32
    %c0_i32_1 = arith.constant 0 : i32
    return %c0_i32, %c0_i32_0 : i32, i32
  }
  func.func @transform_3(%arg0: i32) -> (i32, i32) {
    %c0_i32 = arith.constant 0 : i32
    %c0_i32_0 = arith.constant 0 : i32
    %c0_i32_1 = arith.constant 0 : i32
    return %c0_i32, %c0_i32_0 : i32, i32
  }
  func.func @transform_4(%arg0: i32) -> (i32, i32) {
    %c0_i32 = arith.constant 0 : i32
    %c0_i32_0 = arith.constant 0 : i32
    %c0_i32_1 = arith.constant 0 : i32
    return %c0_i32, %c0_i32_0 : i32, i32
  }
  func.func @transform_5(%arg0: i32) -> (i32, i32) {
    %c0_i32 = arith.constant 0 : i32
    %c0_i32_0 = arith.constant 0 : i32
    %c0_i32_1 = arith.constant 0 : i32
    return %c0_i32, %c0_i32_0 : i32, i32
  }
  func.func @transform_6(%arg0: i32) -> (i32, i32) {
    %c0_i32 = arith.constant 0 : i32
    %c0_i32_0 = arith.constant 0 : i32
    %c0_i32_1 = arith.constant 0 : i32
    return %c0_i32, %c0_i32_0 : i32, i32
  }
  func.func @transform_7(%arg0: i32) -> (i32, i32) {
    %c0_i32 = arith.constant 0 : i32
    %c0_i32_0 = arith.constant 0 : i32
    return %arg0, %c0_i32 : i32, i32
  }
}

</mosaic_0001>

<llo_original>
// kernel: tpu_custom_call.1
$region0: #{tpu_custom_call.1}
  #allocation0 [shape = 'u32[]', space=smem, size = 0x4, offset = 0x4, fixed_abs, tag = 'smem constant byte address 0x4 - core index']
  #allocation1 [shape = 'u32[144,128]{1,0:T(1,128)}', space=vmem, size = 0x12000, scoped, tag = 'internal scratch']
  %s0 = inlined_call_operand.vmem [shape: f32[64,16], index: 0, kind: input, shape index: {}]
  %s1 = inlined_call_operand.vmem [shape: f32[16,32], index: 1, kind: input, shape index: {}]
  %s2 = inlined_call_operand.vmem [shape: f32[32,32], index: 2, kind: input, shape index: {}]
  %s3 = inlined_call_operand.vmem [shape: f32[32,8], index: 3, kind: input, shape index: {}]
  %s4 = inlined_call_operand.vmem [shape: f32[1,32], index: 4, kind: input, shape index: {}]
  %s5 = inlined_call_operand.vmem [shape: f32[1,32], index: 5, kind: input, shape index: {}]
  %s6 = inlined_call_operand.vmem [shape: f32[1,8], index: 6, kind: input, shape index: {}]
  %s7 = inlined_call_operand.vmem [shape: f32[64,8], index: 7, kind: output, shape index: {}]
  %s8 = sld [smem:[#allocation0]]
  $region61: #{tpu_custom_call.1} parent=0
    _
  %s10 = ssub.s32 1, %s8
  %s11 = scalar_select 0, %s10, %s8
  loop: start=0, step=1, limit=4
  $region2: #{tpu_custom_call.1} parent=0 // loop_pre_header
    _
  $region3: #{tpu_custom_call.1} parent=0 // loop_header
    %s13 = sphi 0, %s17
    %p14 = scmp.ge.s32.totalorder %s13, 4
    %s23 = sphi 0, %s25
    %s26 = sphi 0, %s23
    %s27 = sphi 0, %s26
    %s43 = sphi 0, %s27
    %s47 = sphi 0, %s47
    %s49 = sphi 0, %s47
    %s50 = sphi 0, %s49
    %s64 = sphi 0, %s50
    %s68 = sphi 0, %s68
    %s70 = sphi 0, %s68
    %s71 = sphi 0, %s70
    %s85 = sphi 0, %s71
    %s89 = sphi 0, %s89
    %s91 = sphi 0, %s89
    %s92 = sphi 0, %s91
    %s106 = sphi 0, %s92
    %s110 = sphi 0, %s110
    %s112 = sphi 0, %s110
    %s113 = sphi 0, %s112
    %s127 = sphi 0, %s113
    %s131 = sphi 0, %s131
    %s133 = sphi 0, %s131
    %s134 = sphi 0, %s133
    %s148 = sphi 0, %s134
    %s152 = sphi 0, %s152
    %s154 = sphi 0, %s152
    %s155 = sphi 0, %s154
    %s169 = sphi 0, %s155
    %s175 = sphi 0, %s177
    %s178 = sphi 0, %s175
    %s179 = sphi 0, %s178
    %s195 = sphi 0, %s179
  $region4: #{tpu_custom_call.1} parent=0 // loop_header_branch
    %16 = sbr.rel (%p14) target = $region8
  $region5: #{tpu_custom_call.1} parent=0 // loop_body
    %s18 = ssub.s32 %s13, 1
    %s19 = ssub.s32 %s13, 2
    %s20 = sadd.s32 %s13, 1
    %s21 = ssub.s32 %s13, %s20
    %p22 = scmp.eq.s32.totalorder %s21, 0
    %s24 = sadd.s32 %s23, 1
    %s25 = scalar_select %p22, %s23, %s24
    %p28 = pneg %p22
    %p29 = scmp.eq.s32.totalorder %s13, 1
    %p30 = por %p28, %p29
    %p31 = scmp.ne.s32.totalorder %s23, %s26
    %p32 = scmp.eq.s32.totalorder %s13, 0
    %p33 = por %p31, %p32
    %p34 = scmp.ne.s32.totalorder %s23, %s26
    %p35 = scmp.eq.s32.totalorder %s18, 1
    %p36 = por %p34, %p35
    %p37 = scmp.ne.s32.totalorder %s26, %s27
    %p38 = scmp.eq.s32.totalorder %s18, 0
    %p39 = por %p37, %p38
    %p40 = scmp.ne.s32.totalorder %s26, %s27
    %p41 = scmp.eq.s32.totalorder %s19, 1
    %p42 = por %p40, %p41
    %p44 = scmp.ne.s32.totalorder %s27, %s43
    %p45 = scmp.eq.s32.totalorder %s19, 0
    %p46 = por %p44, %p45
    %s48 = sadd.s32 %s47, 1
    %p51 = scmp.eq.s32.totalorder %s13, 1
    %p52 = scmp.ne.s32.totalorder %s47, %s49
    %p53 = scmp.eq.s32.totalorder %s13, 0
    %p54 = por %p52, %p53
    %p55 = scmp.ne.s32.totalorder %s47, %s49
    %p56 = scmp.eq.s32.totalorder %s18, 1
    %p57 = por %p55, %p56
    %p58 = scmp.ne.s32.totalorder %s49, %s50
    %p59 = scmp.eq.s32.totalorder %s18, 0
    %p60 = por %p58, %p59
    %p61 = scmp.ne.s32.totalorder %s49, %s50
    %p62 = scmp.eq.s32.totalorder %s19, 1
    %p63 = por %p61, %p62
    %p65 = scmp.ne.s32.totalorder %s50, %s64
    %p66 = scmp.eq.s32.totalorder %s19, 0
    %p67 = por %p65, %p66
    %s69 = sadd.s32 %s68, 1
    %p72 = scmp.eq.s32.totalorder %s13, 1
    %p73 = scmp.ne.s32.totalorder %s68, %s70
    %p74 = scmp.eq.s32.totalorder %s13, 0
    %p75 = por %p73, %p74
    %p76 = scmp.ne.s32.totalorder %s68, %s70
    %p77 = scmp.eq.s32.totalorder %s18, 1
    %p78 = por %p76, %p77
    %p79 = scmp.ne.s32.totalorder %s70, %s71
    %p80 = scmp.eq.s32.totalorder %s18, 0
    %p81 = por %p79, %p80
    %p82 = scmp.ne.s32.totalorder %s70, %s71
    %p83 = scmp.eq.s32.totalorder %s19, 1
    %p84 = por %p82, %p83
    %p86 = scmp.ne.s32.totalorder %s71, %s85
    %p87 = scmp.eq.s32.totalorder %s19, 0
    %p88 = por %p86, %p87
    %s90 = sadd.s32 %s89, 1
    %p93 = scmp.eq.s32.totalorder %s13, 1
    %p94 = scmp.ne.s32.totalorder %s89, %s91
    %p95 = scmp.eq.s32.totalorder %s13, 0
    %p96 = por %p94, %p95
    %p97 = scmp.ne.s32.totalorder %s89, %s91
    %p98 = scmp.eq.s32.totalorder %s18, 1
    %p99 = por %p97, %p98
    %p100 = scmp.ne.s32.totalorder %s91, %s92
    %p101 = scmp.eq.s32.totalorder %s18, 0
    %p102 = por %p100, %p101
    %p103 = scmp.ne.s32.totalorder %s91, %s92
    %p104 = scmp.eq.s32.totalorder %s19, 1
    %p105 = por %p103, %p104
    %p107 = scmp.ne.s32.totalorder %s92, %s106
    %p108 = scmp.eq.s32.totalorder %s19, 0
    %p109 = por %p107, %p108
    %s111 = sadd.s32 %s110, 1
    %p114 = scmp.eq.s32.totalorder %s13, 1
    %p115 = scmp.ne.s32.totalorder %s110, %s112
    %p116 = scmp.eq.s32.totalorder %s13, 0
    %p117 = por %p115, %p116
    %p118 = scmp.ne.s32.totalorder %s110, %s112
    %p119 = scmp.eq.s32.totalorder %s18, 1
    %p120 = por %p118, %p119
    %p121 = scmp.ne.s32.totalorder %s112, %s113
    %p122 = scmp.eq.s32.totalorder %s18, 0
    %p123 = por %p121, %p122
    %p124 = scmp.ne.s32.totalorder %s112, %s113
    %p125 = scmp.eq.s32.totalorder %s19, 1
    %p126 = por %p124, %p125
    %p128 = scmp.ne.s32.totalorder %s113, %s127
    %p129 = scmp.eq.s32.totalorder %s19, 0
    %p130 = por %p128, %p129
    %s132 = sadd.s32 %s131, 1
    %p135 = scmp.eq.s32.totalorder %s13, 1
    %p136 = scmp.ne.s32.totalorder %s131, %s133
    %p137 = scmp.eq.s32.totalorder %s13, 0
    %p138 = por %p136, %p137
    %p139 = scmp.ne.s32.totalorder %s131, %s133
    %p140 = scmp.eq.s32.totalorder %s18, 1
    %p141 = por %p139, %p140
    %p142 = scmp.ne.s32.totalorder %s133, %s134
    %p143 = scmp.eq.s32.totalorder %s18, 0
    %p144 = por %p142, %p143
    %p145 = scmp.ne.s32.totalorder %s133, %s134
    %p146 = scmp.eq.s32.totalorder %s19, 1
    %p147 = por %p145, %p146
    %p149 = scmp.ne.s32.totalorder %s134, %s148
    %p150 = scmp.eq.s32.totalorder %s19, 0
    %p151 = por %p149, %p150
    %s153 = sadd.s32 %s152, 1
    %p156 = scmp.eq.s32.totalorder %s13, 1
    %p157 = scmp.ne.s32.totalorder %s152, %s154
    %p158 = scmp.eq.s32.totalorder %s13, 0
    %p159 = por %p157, %p158
    %p160 = scmp.ne.s32.totalorder %s152, %s154
    %p161 = scmp.eq.s32.totalorder %s18, 1
    %p162 = por %p160, %p161
    %p163 = scmp.ne.s32.totalorder %s154, %s155
    %p164 = scmp.eq.s32.totalorder %s18, 0
    %p165 = por %p163, %p164
    %p166 = scmp.ne.s32.totalorder %s154, %s155
    %p167 = scmp.eq.s32.totalorder %s19, 1
    %p168 = por %p166, %p167
    %p170 = scmp.ne.s32.totalorder %s155, %s169
    %p171 = scmp.eq.s32.totalorder %s19, 0
    %p172 = por %p170, %p171
    %s173 = ssub.s32 %s13, %s20
    %p174 = scmp.eq.s32.totalorder %s173, 0
    %s176 = sadd.s32 %s175, 1
    %s177 = scalar_select %p174, %s175, %s176
    %p180 = pneg %p174
    %p181 = scmp.eq.s32.totalorder %s13, 1
    %p182 = por %p180, %p181
    %p183 = scmp.ne.s32.totalorder %s175, %s178
    %p184 = scmp.eq.s32.totalorder %s13, 0
    %p185 = por %p183, %p184
    %p186 = scmp.ne.s32.totalorder %s175, %s178
    %p187 = scmp.eq.s32.totalorder %s18, 1
    %p188 = por %p186, %p187
    %p189 = scmp.ne.s32.totalorder %s178, %s179
    %p190 = scmp.eq.s32.totalorder %s18, 0
    %p191 = por %p189, %p190
    %p192 = scmp.ne.s32.totalorder %s178, %s179
    %p193 = scmp.eq.s32.totalorder %s19, 1
    %p194 = por %p192, %p193
    %p196 = scmp.ne.s32.totalorder %s179, %s195
    %p197 = scmp.eq.s32.totalorder %s19, 0
    %p198 = por %p196, %p197
    %p199 = scmp.le.s32.totalorder 1, %s13
    %p200 = scmp.lt.s32.totalorder %s13, 3
    %p201 = pnand %p199, %p200
    %p202 = pneg %p201
    // Predicated region
    $region9: #{tpu_custom_call.1} parent=5 // pred_check
      _
    $region10: #{tpu_custom_call.1} parent=5 // pred_check_branch
      %204 = sbr.rel (%p201) target = $region12
    $region11: #{tpu_custom_call.1} parent=5 // pred_region
      %s205 = ssub.s32 %s13, 1
      // Predicated region
      $region13: #{tpu_custom_call.1} parent=11 // pred_check
        %p206 = pneg %p60
      $region14: #{tpu_custom_call.1} parent=11 // pred_check_branch
        %208 = sbr.rel (%p206) target = $region16
      $region15: #{tpu_custom_call.1} parent=11 // pred_region
        _
      $region16: #{tpu_custom_call.1} parent=11 // pred_fallthru
        _
      // Predicated region
      $region17: #{tpu_custom_call.1} parent=11 // pred_check
        %p209 = pneg %p81
      $region18: #{tpu_custom_call.1} parent=11 // pred_check_branch
        %211 = sbr.rel (%p209) target = $region20
      $region19: #{tpu_custom_call.1} parent=11 // pred_region
        _
      $region20: #{tpu_custom_call.1} parent=11 // pred_fallthru
        _
      // Predicated region
      $region21: #{tpu_custom_call.1} parent=11 // pred_check
        %p212 = pneg %p102
      $region22: #{tpu_custom_call.1} parent=11 // pred_check_branch
        %214 = sbr.rel (%p212) target = $region24
      $region23: #{tpu_custom_call.1} parent=11 // pred_region
        _
      $region24: #{tpu_custom_call.1} parent=11 // pred_fallthru
        _
      // Predicated region
      $region25: #{tpu_custom_call.1} parent=11 // pred_check
        %p215 = pneg %p123
      $region26: #{tpu_custom_call.1} parent=11 // pred_check_branch
        %217 = sbr.rel (%p215) target = $region28
      $region27: #{tpu_custom_call.1} parent=11 // pred_region
        _
      $region28: #{tpu_custom_call.1} parent=11 // pred_fallthru
        _
      // Predicated region
      $region29: #{tpu_custom_call.1} parent=11 // pred_check
        %p218 = pneg %p144
      $region30: #{tpu_custom_call.1} parent=11 // pred_check_branch
        %220 = sbr.rel (%p218) target = $region32
      $region31: #{tpu_custom_call.1} parent=11 // pred_region
        _
      $region32: #{tpu_custom_call.1} parent=11 // pred_fallthru
        _
      // Predicated region
      $region33: #{tpu_custom_call.1} parent=11 // pred_check
        %p221 = pneg %p165
      $region34: #{tpu_custom_call.1} parent=11 // pred_check_branch
        %223 = sbr.rel (%p221) target = $region36
      $region35: #{tpu_custom_call.1} parent=11 // pred_region
        _
      $region36: #{tpu_custom_call.1} parent=11 // pred_fallthru
        _
    $region12: #{tpu_custom_call.1} parent=5 // pred_fallthru
      _
    %p224 = scmp.lt.s32.totalorder %s13, 2
    // Predicated region
    $region37: #{tpu_custom_call.1} parent=5 // pred_check
      %p225 = pneg %p224
    $region38: #{tpu_custom_call.1} parent=5 // pred_check_branch
      %227 = sbr.rel (%p225) target = $region40
    $region39: #{tpu_custom_call.1} parent=5 // pred_region
      // Predicated region
      $region41: #{tpu_custom_call.1} parent=39 // pred_check
        %p228 = pneg %p33
      $region42: #{tpu_custom_call.1} parent=39 // pred_check_branch
        %230 = sbr.rel (%p228) target = $region44
      $region43: #{tpu_custom_call.1} parent=39 // pred_region
        %s231 = smul.u32 4, %s13
        %p232 = scmp.lt.s32.totalorder %s231, 7
        %s233 = scalar_select %p232, %s231, 7
        %s234 = smul.addr %s233, 8
        %s235 = scalar_lea.vmem %s0, %s234
        %s236 = smul.u32 4, %s13
      $region44: #{tpu_custom_call.1} parent=39 // pred_fallthru
        _
    $region40: #{tpu_custom_call.1} parent=5 // pred_fallthru
      _
    %p237 = scmp.le.s32.totalorder 1, %s13
    %p238 = scmp.lt.s32.totalorder %s13, 3
    %p239 = pnand %p237, %p238
    %p240 = pneg %p239
    // Predicated region
    $region45: #{tpu_custom_call.1} parent=5 // pred_check
      _
    $region46: #{tpu_custom_call.1} parent=5 // pred_check_branch
      %242 = sbr.rel (%p239) target = $region48
    $region47: #{tpu_custom_call.1} parent=5 // pred_region
      %s243 = ssub.s32 %s13, 1
      %s244 = smul.u32 4, %s18
      %p245 = scmp.lt.s32.totalorder %s244, 7
      %s246 = scalar_select %p245, %s244, 7
      %s247 = smul.addr %s246, 8
      %s248 = scalar_lea.vmem %s0, %s247
      %p249 = pneg %p39
      %p250 = pneg %p36
      %p251 = pneg %p60
      %p252 = pneg %p57
      %p253 = pneg %p81
      %p254 = pneg %p78
      %p255 = pneg %p102
      %p256 = pneg %p99
      %p257 = pneg %p123
      %p258 = pneg %p120
      %p259 = pneg %p144
      %p260 = pneg %p141
      %p261 = pneg %p165
      %p262 = pneg %p162
      %p263 = pneg %p191
      %p264 = pneg %p188
      %s265 = smul.u32 4, %s18
      %p266 = scmp.lt.s32.totalorder %s265, 7
      %s267 = scalar_select %p266, %s265, 7
      %s268 = smul.addr %s267, 8
      %s269 = scalar_lea.vmem %s7, %s268
      %s270 = smul.u32 4, %s18
      %p271 = scmp.lt.s32.totalorder %s270, 7
      %s272 = scalar_select %p271, %s270, 7
      %s273 = smul.addr %s272, 8
      %s274 = scalar_lea.vmem %s0, %s273
      %s275 = smul.u32 4, %s18
      %s276 = smul.u32 4, %s18
      %p277 = scmp.lt.s32.totalorder %s276, 7
      %s278 = scalar_select %p277, %s276, 7
      %s279 = smul.addr %s278, 8
      %s280 = scalar_lea.vmem %s7, %s279
      %s281 = smul.u32 4, %s18
      %v282 = vld [vmem:[%s274] sm:$0xff]
      %v283 = vld [vmem:[%s274 + $0x8] sm:$0xff]
      %v284 = vld [vmem:[%s274 + $0x10] sm:$0xff]
      %v285 = vld [vmem:[%s274 + $0x18] sm:$0xff]
      %v286 = vld [vmem:[%s1] sm:$0xff]
      %v287 = vld [vmem:[%s1 + $0x8] sm:$0xff]
      %v288 = vld [vmem:[%s4] sm:$0x1]
      %v290 = vlaneseq
      %v291 = vshrl.u32 %v290, 7
      %v292 = vsub.s32 0, %v291
      %v293 = vrot.slane %v288, %v292
      %vm295 = vcmask 130048
      %v297 = vsel %vm295, %v282, 0
      %v300 = vsel %vm295, %v283, 0
      %v303 = vsel %vm295, %v284, 0
      %v306 = vsel %vm295, %v285, 0
      %308 = vmatprep.subr.mxu0 0.0
      %309 = vmatpush1.msra.mxu0 %v286
      %310 = vmatprep.subr.mxu0 0.0
      %311 = vmatpush1.msra.mxu0 %v287
      %312 = vmatprep.subr.mxu0 0.0
      %313 = vmatpush1.msra.mxu0 0.0
      %314 = vmatprep.subr.mxu0 0.0
      %315 = vmatpush1.msra.mxu0 0.0
      %316 = vmatprep.subr.mxu0 0.0
      %317 = vmatpush1.msra.mxu0 0.0
      %318 = vmatprep.subr.mxu0 0.0
      %319 = vmatpush1.msra.mxu0 0.0
      %320 = vmatprep.subr.mxu0 0.0
      %321 = vmatpush1.msra.mxu0 0.0
      %322 = vmatprep.subr.mxu0 0.0
      %323 = vmatpush1.msra.mxu0 0.0
      %324 = vmatprep.subr.mxu0 0.0
      %325 = vmatpush1.msra.mxu0 0.0
      %326 = vmatprep.subr.mxu0 0.0
      %327 = vmatpush1.msra.mxu0 0.0
      %328 = vmatprep.subr.mxu0 0.0
      %329 = vmatpush1.msra.mxu0 0.0
      %330 = vmatprep.subr.mxu0 0.0
      %331 = vmatpush1.msra.mxu0 0.0
      %332 = vmatprep.subr.mxu0 0.0
      %333 = vmatpush1.msra.mxu0 0.0
      %334 = vmatprep.subr.mxu0 0.0
      %335 = vmatpush1.msra.mxu0 0.0
      %336 = vmatprep.subr.mxu0 0.0
      %337 = vmatpush1.msra.mxu0 0.0
      %338 = vmatprep.subr.mxu0 0.0
      %339 = vmatpush1.msra.mxu0 0.0
      %340 = vmatprep.subr.mxu0 0.0
      %341 = vmatpush1.msra.mxu0 0.0
      %342 = vmatprep.subr.mxu0 0.0
      %343 = vmatpush1.msra.mxu0 0.0
      %344 = vmatprep.subr.mxu0 0.0
      %345 = vmatpush1.msra.mxu0 0.0
      %346 = vmatprep.subr.mxu0 0.0
      %347 = vmatpush1.msra.mxu0 0.0
      %348 = vmatprep.subr.mxu0 0.0
      %349 = vmatpush1.msra.mxu0 0.0
      %350 = vmatprep.subr.mxu0 0.0
      %351 = vmatpush1.msra.mxu0 0.0
      %352 = vmatprep.subr.mxu0 0.0
      %353 = vmatpush1.msra.mxu0 0.0
      %354 = vmatprep.subr.mxu0 0.0
      %355 = vmatpush1.msra.mxu0 0.0
      %356 = vmatprep.subr.mxu0 0.0
      %357 = vmatpush1.msra.mxu0 0.0
      %358 = vmatprep.subr.mxu0 0.0
      %359 = vmatpush1.msra.mxu0 0.0
      %360 = vmatprep.subr.mxu0 0.0
      %361 = vmatpush1.msra.mxu0 0.0
      %362 = vmatprep.subr.mxu0 0.0
      %363 = vmatpush1.msra.mxu0 0.0
      %364 = vmatprep.subr.mxu0 0.0
      %365 = vmatpush1.msra.mxu0 0.0
      %366 = vmatprep.subr.mxu0 0.0
      %367 = vmatpush1.msra.mxu0 0.0
      %368 = vmatprep.subr.mxu0 0.0
      %369 = vmatpush1.msra.mxu0 0.0
      %370 = vmatprep.subr.mxu0 0.0
      %371 = vmatpush1.msra.mxu0 0.0
      %372 = vmatprep.mubr.f32.mxu0 0.0
      %373 = vmatmul.mubr.f32.gmra.mrb[0].mxu0 %v297
      %v374 = vpop.f32.mrb[0].mxu0
      %v375 = vadd.f32 %v293, %v374
      %v376 = vpop.f32.mrb[0].mxu0
      %377 = vmatprep.mubr.f32.mxu0 0.0
      %378 = vmatmul.mubr.f32.gmra.mrb[0].mxu0 %v300
      %v379 = vpop.f32.mrb[0].mxu0
      %v380 = vadd.f32 %v293, %v379
      %v381 = vpop.f32.mrb[0].mxu0
      %382 = vmatprep.mubr.f32.mxu0 0.0
      %383 = vmatmul.mubr.f32.gmra.mrb[0].mxu0 %v303
      %v384 = vpop.f32.mrb[0].mxu0
      %v385 = vadd.f32 %v293, %v384
      %v386 = vpop.f32.mrb[0].mxu0
      %387 = vmatprep.mubr.f32.mxu0 0.0
      %388 = vmatmul.mubr.f32.gmra.mrb[0].mxu0 %v306
      %v389 = vpop.f32.mrb[0].mxu0
      %v390 = vadd.f32 %v293, %v389
      %v391 = vpop.f32.mrb[0].mxu0
      %392 = vdwg.mxu0
      %v393 = vmax.f32 %v375, 0.0
      %v394 = vmax.f32 %v380, 0.0
      %v395 = vmax.f32 %v385, 0.0
      %v396 = vmax.f32 %v390, 0.0
      %v397 = vld [vmem:[%s2] sm:$0xff]
      %v398 = vld [vmem:[%s2 + $0x8] sm:$0xff]
      %v399 = vld [vmem:[%s2 + $0x10] sm:$0xff]
      %v400 = vld [vmem:[%s2 + $0x18] sm:$0xff]
      %v401 = vld [vmem:[%s5] sm:$0x1]
      %v403 = vlaneseq
      %v404 = vshrl.u32 %v403, 7
      %v405 = vsub.s32 0, %v404
      %v406 = vrot.slane %v401, %v405
      %vm408 = vcmask 261120
      %v410 = vsel %vm408, %v393, 0
      %v413 = vsel %vm408, %v394, 0
      %v416 = vsel %vm408, %v395, 0
      %v419 = vsel %vm408, %v396, 0
      %421 = vmatprep.subr.mxu0 0.0
      %422 = vmatpush1.msra.mxu0 %v397
      %423 = vmatprep.subr.mxu0 0.0
      %424 = vmatpush1.msra.mxu0 %v398
      %425 = vmatprep.subr.mxu0 0.0
      %426 = vmatpush1.msra.mxu0 %v399
      %427 = vmatprep.subr.mxu0 0.0
      %428 = vmatpush1.msra.mxu0 %v400
      %429 = vmatprep.subr.mxu0 0.0
      %430 = vmatpush1.msra.mxu0 0.0
      %431 = vmatprep.subr.mxu0 0.0
      %432 = vmatpush1.msra.mxu0 0.0
      %433 = vmatprep.subr.mxu0 0.0
      %434 = vmatpush1.msra.mxu0 0.0
      %435 = vmatprep.subr.mxu0 0.0
      %436 = vmatpush1.msra.mxu0 0.0
      %437 = vmatprep.subr.mxu0 0.0
      %438 = vmatpush1.msra.mxu0 0.0
      %439 = vmatprep.subr.mxu0 0.0
      %440 = vmatpush1.msra.mxu0 0.0
      %441 = vmatprep.subr.mxu0 0.0
      %442 = vmatpush1.msra.mxu0 0.0
      %443 = vmatprep.subr.mxu0 0.0
      %444 = vmatpush1.msra.mxu0 0.0
      %445 = vmatprep.subr.mxu0 0.0
      %446 = vmatpush1.msra.mxu0 0.0
      %447 = vmatprep.subr.mxu0 0.0
      %448 = vmatpush1.msra.mxu0 0.0
      %449 = vmatprep.subr.mxu0 0.0
      %450 = vmatpush1.msra.mxu0 0.0
      %451 = vmatprep.subr.mxu0 0.0
      %452 = vmatpush1.msra.mxu0 0.0
      %453 = vmatprep.subr.mxu0 0.0
      %454 = vmatpush1.msra.mxu0 0.0
      %455 = vmatprep.subr.mxu0 0.0
      %456 = vmatpush1.msra.mxu0 0.0
      %457 = vmatprep.subr.mxu0 0.0
      %458 = vmatpush1.msra.mxu0 0.0
      %459 = vmatprep.subr.mxu0 0.0
      %460 = vmatpush1.msra.mxu0 0.0
      %461 = vmatprep.subr.mxu0 0.0
      %462 = vmatpush1.msra.mxu0 0.0
      %463 = vmatprep.subr.mxu0 0.0
      %464 = vmatpush1.msra.mxu0 0.0
      %465 = vmatprep.subr.mxu0 0.0
      %466 = vmatpush1.msra.mxu0 0.0
      %467 = vmatprep.subr.mxu0 0.0
      %468 = vmatpush1.msra.mxu0 0.0
      %469 = vmatprep.subr.mxu0 0.0
      %470 = vmatpush1.msra.mxu0 0.0
      %471 = vmatprep.subr.mxu0 0.0
      %472 = vmatpush1.msra.mxu0 0.0
      %473 = vmatprep.subr.mxu0 0.0
      %474 = vmatpush1.msra.mxu0 0.0
      %475 = vmatprep.subr.mxu0 0.0
      %476 = vmatpush1.msra.mxu0 0.0
      %477 = vmatprep.subr.mxu0 0.0
      %478 = vmatpush1.msra.mxu0 0.0
      %479 = vmatprep.subr.mxu0 0.0
      %480 = vmatpush1.msra.mxu0 0.0
      %481 = vmatprep.subr.mxu0 0.0
      %482 = vmatpush1.msra.mxu0 0.0
      %483 = vmatprep.subr.mxu0 0.0
      %484 = vmatpush1.msra.mxu0 0.0
      %485 = vmatprep.mubr.f32.mxu0 0.0
      %486 = vmatmul.mubr.f32.gmra.mrb[0].mxu0 %v410
      %v487 = vpop.f32.mrb[0].mxu0
      %v488 = vadd.f32 %v406, %v487
      %v489 = vpop.f32.mrb[0].mxu0
      %490 = vmatprep.mubr.f32.mxu0 0.0
      %491 = vmatmul.mubr.f32.gmra.mrb[0].mxu0 %v413
      %v492 = vpop.f32.mrb[0].mxu0
      %v493 = vadd.f32 %v406, %v492
      %v494 = vpop.f32.mrb[0].mxu0
      %495 = vmatprep.mubr.f32.mxu0 0.0
      %496 = vmatmul.mubr.f32.gmra.mrb[0].mxu0 %v416
      %v497 = vpop.f32.mrb[0].mxu0
      %v498 = vadd.f32 %v406, %v497
      %v499 = vpop.f32.mrb[0].mxu0
      %500 = vmatprep.mubr.f32.mxu0 0.0
      %501 = vmatmul.mubr.f32.gmra.mrb[0].mxu0 %v419
      %v502 = vpop.f32.mrb[0].mxu0
      %v503 = vadd.f32 %v406, %v502
      %v504 = vpop.f32.mrb[0].mxu0
      %505 = vdwg.mxu0
      %v506 = vmax.f32 %v488, 0.0
      %v507 = vmax.f32 %v493, 0.0
      %v508 = vmax.f32 %v498, 0.0
      %v509 = vmax.f32 %v503, 0.0
      %v510 = vadd.f32 %v506, %v393
      %v511 = vadd.f32 %v507, %v394
      %v512 = vadd.f32 %v508, %v395
      %v513 = vadd.f32 %v509, %v396
      %v514 = vld [vmem:[%s3] sm:$0xff]
      %v515 = vld [vmem:[%s3 + $0x8] sm:$0xff]
      %v516 = vld [vmem:[%s3 + $0x10] sm:$0xff]
      %v517 = vld [vmem:[%s3 + $0x18] sm:$0xff]
      %v518 = vld [vmem:[%s6] sm:$0x1]
      %v520 = vlaneseq
      %v521 = vshrl.u32 %v520, 7
      %v522 = vsub.s32 0, %v521
      %v523 = vrot.slane %v518, %v522
      %v526 = vsel %vm408, %v510, 0
      %v529 = vsel %vm408, %v511, 0
      %v532 = vsel %vm408, %v512, 0
      %v535 = vsel %vm408, %v513, 0
      %537 = vmatprep.subr.mxu0 0.0
      %538 = vmatpush1.msra.mxu0 %v514
      %539 = vmatprep.subr.mxu0 0.0
      %540 = vmatpush1.msra.mxu0 %v515
      %541 = vmatprep.subr.mxu0 0.0
      %542 = vmatpush1.msra.mxu0 %v516
      %543 = vmatprep.subr.mxu0 0.0
      %544 = vmatpush1.msra.mxu0 %v517
      %545 = vmatprep.subr.mxu0 0.0
      %546 = vmatpush1.msra.mxu0 0.0
      %547 = vmatprep.subr.mxu0 0.0
      %548 = vmatpush1.msra.mxu0 0.0
      %549 = vmatprep.subr.mxu0 0.0
      %550 = vmatpush1.msra.mxu0 0.0
      %551 = vmatprep.subr.mxu0 0.0
      %552 = vmatpush1.msra.mxu0 0.0
      %553 = vmatprep.subr.mxu0 0.0
      %554 = vmatpush1.msra.mxu0 0.0
      %555 = vmatprep.subr.mxu0 0.0
      %556 = vmatpush1.msra.mxu0 0.0
      %557 = vmatprep.subr.mxu0 0.0
      %558 = vmatpush1.msra.mxu0 0.0
      %559 = vmatprep.subr.mxu0 0.0
      %560 = vmatpush1.msra.mxu0 0.0
      %561 = vmatprep.subr.mxu0 0.0
      %562 = vmatpush1.msra.mxu0 0.0
      %563 = vmatprep.subr.mxu0 0.0
      %564 = vmatpush1.msra.mxu0 0.0
      %565 = vmatprep.subr.mxu0 0.0
      %566 = vmatpush1.msra.mxu0 0.0
      %567 = vmatprep.subr.mxu0 0.0
      %568 = vmatpush1.msra.mxu0 0.0
      %569 = vmatprep.subr.mxu0 0.0
      %570 = vmatpush1.msra.mxu0 0.0
      %571 = vmatprep.subr.mxu0 0.0
      %572 = vmatpush1.msra.mxu0 0.0
      %573 = vmatprep.subr.mxu0 0.0
      %574 = vmatpush1.msra.mxu0 0.0
      %575 = vmatprep.subr.mxu0 0.0
      %576 = vmatpush1.msra.mxu0 0.0
      %577 = vmatprep.subr.mxu0 0.0
      %578 = vmatpush1.msra.mxu0 0.0
      %579 = vmatprep.subr.mxu0 0.0
      %580 = vmatpush1.msra.mxu0 0.0
      %581 = vmatprep.subr.mxu0 0.0
      %582 = vmatpush1.msra.mxu0 0.0
      %583 = vmatprep.subr.mxu0 0.0
      %584 = vmatpush1.msra.mxu0 0.0
      %585 = vmatprep.subr.mxu0 0.0
      %586 = vmatpush1.msra.mxu0 0.0
      %587 = vmatprep.subr.mxu0 0.0
      %588 = vmatpush1.msra.mxu0 0.0
      %589 = vmatprep.subr.mxu0 0.0
      %590 = vmatpush1.msra.mxu0 0.0
      %591 = vmatprep.subr.mxu0 0.0
      %592 = vmatpush1.msra.mxu0 0.0
      %593 = vmatprep.subr.mxu0 0.0
      %594 = vmatpush1.msra.mxu0 0.0
      %595 = vmatprep.subr.mxu0 0.0
      %596 = vmatpush1.msra.mxu0 0.0
      %597 = vmatprep.subr.mxu0 0.0
      %598 = vmatpush1.msra.mxu0 0.0
      %599 = vmatprep.subr.mxu0 0.0
      %600 = vmatpush1.msra.mxu0 0.0
      %601 = vmatprep.mubr.f32.mxu0 0.0
      %602 = vmatmul.mubr.f32.gmra.mrb[0].mxu0 %v526
      %v603 = vpop.f32.mrb[0].mxu0
      %v604 = vadd.f32 %v523, %v603
      %v605 = vpop.f32.mrb[0].mxu0
      %606 = vmatprep.mubr.f32.mxu0 0.0
      %607 = vmatmul.mubr.f32.gmra.mrb[0].mxu0 %v529
      %v608 = vpop.f32.mrb[0].mxu0
      %v609 = vadd.f32 %v523, %v608
      %v610 = vpop.f32.mrb[0].mxu0
      %611 = vmatprep.mubr.f32.mxu0 0.0
      %612 = vmatmul.mubr.f32.gmra.mrb[0].mxu0 %v532
      %v613 = vpop.f32.mrb[0].mxu0
      %v614 = vadd.f32 %v523, %v613
      %v615 = vpop.f32.mrb[0].mxu0
      %616 = vmatprep.mubr.f32.mxu0 0.0
      %617 = vmatmul.mubr.f32.gmra.mrb[0].mxu0 %v535
      %v618 = vpop.f32.mrb[0].mxu0
      %v619 = vadd.f32 %v523, %v618
      %v620 = vpop.f32.mrb[0].mxu0
      %621 = vdwg.mxu0
      %v622 = vxor.u32 %v604, 2147483648
      %v623 = vxor.u32 %v609, 2147483648
      %v624 = vxor.u32 %v614, 2147483648
      %v625 = vxor.u32 %v619, 2147483648
      %v626 = vmul.f32 %v622, 1.442695
      %v627 = vpow.pop %v626
      %v628 = vmul.f32 %v623, 1.442695
      %v629 = vpow.pop %v628
      %v630 = vmul.f32 %v624, 1.442695
      %v631 = vpow.pop %v630
      %v632 = vmul.f32 %v625, 1.442695
      %v633 = vpow.pop %v632
      %v634 = vadd.f32 %v627, 1.0
      %v635 = vadd.f32 %v629, 1.0
      %v636 = vadd.f32 %v631, 1.0
      %v637 = vadd.f32 %v633, 1.0
      %v638 = vrcp.pop %v634
      %v639 = vmul.f32 1.0, %v638
      %v640 = vrcp.pop %v635
      %v641 = vmul.f32 1.0, %v640
      %v642 = vrcp.pop %v636
      %v643 = vmul.f32 1.0, %v642
      %v644 = vrcp.pop %v637
      %v645 = vmul.f32 1.0, %v644
      %vm646 = vcmask 64512
      %647 = vst.msk [vmem:[%s280] sm:$0xff] %vm646, %v639
      %648 = vst.msk [vmem:[%s280 + $0x8] sm:$0xff] %vm646, %v641
      %649 = vst.msk [vmem:[%s280 + $0x10] sm:$0xff] %vm646, %v643
      %650 = vst.msk [vmem:[%s280 + $0x18] sm:$0xff] %vm646, %v645
      %s651 = smul.u32 4, %s18
      %p652 = scmp.lt.s32.totalorder %s651, 7
      %s653 = scalar_select %p652, %s651, 7
      %s654 = smul.addr %s653, 8
      %s655 = scalar_lea.vmem %s7, %s654
      // Predicated region
      $region49: #{tpu_custom_call.1} parent=47 // pred_check
        %p656 = pneg %p188
      $region50: #{tpu_custom_call.1} parent=47 // pred_check_branch
        %658 = sbr.rel (%p656) target = $region52
      $region51: #{tpu_custom_call.1} parent=47 // pred_region
        %s659 = smul.u32 4, %s18
      $region52: #{tpu_custom_call.1} parent=47 // pred_fallthru
        _
    $region48: #{tpu_custom_call.1} parent=5 // pred_fallthru
      _
    %p660 = scmp.le.s32.totalorder 2, %s13
    // Predicated region
    $region53: #{tpu_custom_call.1} parent=5 // pred_check
      %p661 = pneg %p660
    $region54: #{tpu_custom_call.1} parent=5 // pred_check_branch
      %663 = sbr.rel (%p661) target = $region56
    $region55: #{tpu_custom_call.1} parent=5 // pred_region
      %s664 = ssub.s32 %s13, 2
      // Predicated region
      $region57: #{tpu_custom_call.1} parent=55 // pred_check
        %p665 = pneg %p194
      $region58: #{tpu_custom_call.1} parent=55 // pred_check_branch
        %667 = sbr.rel (%p665) target = $region60
      $region59: #{tpu_custom_call.1} parent=55 // pred_region
        %s668 = smul.u32 4, %s19
        %p669 = scmp.lt.s32.totalorder %s668, 7
        %s670 = scalar_select %p669, %s668, 7
        %s671 = smul.addr %s670, 8
        %s672 = scalar_lea.vmem %s7, %s671
      $region60: #{tpu_custom_call.1} parent=55 // pred_fallthru
        _
    $region56: #{tpu_custom_call.1} parent=5 // pred_fallthru
      _
  $region6: #{tpu_custom_call.1} parent=0 // loop_footer
    %s17 = sadd.s32 1, %s13
  $region7: #{tpu_custom_call.1} parent=0 // loop_footer_branch
    %12 = sbr.rel target = $region3
  $region8: #{tpu_custom_call.1} parent=0 // loop_exit
    _

</llo_original>
